<compile_context>
chip_gen: v6e
topology: v6e:2x2x1
jax: 0.10.0
libtpu: 0.0.40
codegen_flags: <defaults>
</compile_context>

<pallas_src>
import functools

import jax
import jax.numpy as jnp
from jax import lax
from jax.experimental import pallas as pl
from jax.experimental.pallas import tpu as pltpu


def _round_up(x: int, m: int) -> int:
    return ((x + m - 1) // m) * m


def _cdiv(a: int, b: int) -> int:
    return (a + b - 1) // b


def _pick_tile(dim: int, cap: int, align: int) -> int:
    """Pick a tile size for `dim`.

    Preference order:
      1. dim fits in one tile           -> round_up(dim, align)  (tiny pad only)
      2. a large exact divisor of dim   -> no padding at all
      3. block-count based sizing       -> minimal padding (vs. min(cap, dim))
    """
    if dim <= 0:
        return align
    cap = max(align, (cap // align) * align)
    if dim <= cap:
        return _round_up(dim, align)
    if dim % align == 0:
        # Look for an exact divisor (multiple of `align`) in [cap/2, cap].
        t = cap
        lo = max(align, (cap // 2 // align) * align)
        while t >= lo:
            if dim % t == 0:
                return t
            t -= align
    nblk = _cdiv(dim, cap)
    return _round_up(_cdiv(dim, nblk), align)


def _linear_kernel_f32(x_ref, w_ref, b_ref, o_ref):
    # f32 output: accumulate directly into the resident output block (its block
    # index is independent of k, so it stays in VMEM across the K axis).
    # x_ref: [tm, tk], w_ref: [tn, tk] (native nn.Linear layout), b_ref: [1, tn]
    k = pl.program_id(2)

    @pl.when(k == 0)
    def _():
        o_ref[...] = jnp.broadcast_to(b_ref[...].astype(jnp.float32), o_ref.shape)

    o_ref[...] += lax.dot_general(
        x_ref[...],
        w_ref[...],
        dimension_numbers=(((1,), (1,)), ((), ())),
        preferred_element_type=jnp.float32,
    )


def _linear_kernel_acc(x_ref, w_ref, b_ref, o_ref, acc_ref):
    # Non-f32 output: f32 VMEM accumulator, bias folded into the init,
    # single downcast + store at the last K step.
    k = pl.program_id(2)

    @pl.when(k == 0)
    def _():
        acc_ref[...] = jnp.broadcast_to(
            b_ref[...].astype(jnp.float32), acc_ref.shape
        )

    acc_ref[...] += lax.dot_general(
        x_ref[...],
        w_ref[...],
        dimension_numbers=(((1,), (1,)), ((), ())),
        preferred_element_type=jnp.float32,
    )

    @pl.when(k == pl.num_programs(2) - 1)
    def _():
        o_ref[...] = acc_ref[...].astype(o_ref.dtype)


@functools.partial(
    jax.jit, static_argnames=("tm_cap", "tn_cap", "tk_cap", "use_bf16")
)
def poincare_wrapped_linear(
    x, weight, bias=None, *, tm_cap=512, tn_cap=512, tk_cap=1024, use_bf16=False
):
    """Forward pass of PoincareBallWrappedLinear.

    x:      [..., in_features]
    weight: [out_features, in_features]   (PyTorch nn.Linear convention)
    bias:   [out_features] or None
    returns [..., out_features]  (same dtype as x)
    """
    out_features, in_features = weight.shape
    assert x.shape[-1] == in_features

    lead_shape = x.shape[:-1]
    m = 1
    for d in lead_shape:
        m *= d
    k_dim = in_features
    n_dim = out_features
    out_dtype = jnp.dtype(x.dtype)

    # Degenerate shapes: nothing to compute.
    if m == 0 or n_dim == 0:
        return jnp.zeros((*lead_shape, n_dim), dtype=out_dtype)

    if bias is None:
        bias = jnp.zeros((n_dim,), dtype=weight.dtype)

    # --- compute / alignment setup ---------------------------------------
    m_align = 16 if use_bf16 else 8          # bf16 packs 16 rows per sublane
    in_itemsize = 2 if use_bf16 else out_dtype.itemsize
    out_itemsize = out_dtype.itemsize
    direct_f32 = out_dtype == jnp.dtype(jnp.float32)

    # --- tile selection (block-count / exact-divisor based) ---------------
    tm = _pick_tile(m, tm_cap, m_align)
    tn = _pick_tile(n_dim, tn_cap, 128)
    tk = _pick_tile(k_dim, tk_cap, 128)

    # Megacore (v7x, 2 TCs): keep >= 2 blocks on a parallel axis when possible.
    if _cdiv(m, tm) * _cdiv(n_dim, tn) == 1:
        if tn >= 256:
            tn = _round_up(_cdiv(_round_up(n_dim, 128), 2), 128)
        elif tm >= 2 * m_align:
            tm = _round_up(_cdiv(_round_up(m, m_align), 2), m_align)

    # VMEM budget: 2x double-buffered x/W tiles + 2x out (+ acc, + bias); keep
    # under ~28 MiB so the 32 MiB scoped limit (and v7x's 64 MiB physical VMEM)
    # is comfortably respected on every generation.
    def _footprint(tm_, tn_, tk_):
        f = (
            2 * (tm_ * tk_ + tn_ * tk_) * in_itemsize  # x + W, double-buffered
            + 2 * tm_ * tn_ * out_itemsize             # output, double-buffered
            + 2 * tn_ * 4                              # bias (f32)
        )
        if not direct_f32:
            f += tm_ * tn_ * 4                         # f32 accumulator scratch
        return f

    budget = 28 << 20
    while _footprint(tm, tn, tk) > budget:
        if tk > 128:
            tk = max(128, ((tk // 2) // 128) * 128)
        elif tn > 128:
            tn = max(128, ((tn // 2) // 128) * 128)
        elif tm > m_align:
            tm = max(m_align, ((tm // 2) // m_align) * m_align)
        else:
            break

    mp = _round_up(m, tm)
    np_ = _round_up(n_dim, tn)
    kp = _round_up(k_dim, tk)
    grid = (mp // tm, np_ // tn, kp // tk)

    # --- pad operands only when actually needed ---------------------------
    # (exact-divisor tile choice avoids the full-HBM round trip of jnp.pad on
    #  the activations in the common "dims already multiples of 128" case)
    x2d = x.reshape(m, k_dim)
    if (mp, kp) != (m, k_dim):
        x2d = jnp.pad(x2d, ((0, mp - m), (0, kp - k_dim)))
    w = weight
    if (np_, kp) != (n_dim, k_dim):
        w = jnp.pad(w, ((0, np_ - n_dim), (0, kp - k_dim)))
    if use_bf16:
        x2d = x2d.astype(jnp.bfloat16)
        w = w.astype(jnp.bfloat16)

    b2d = bias.astype(jnp.float32).reshape(1, n_dim)
    if np_ != n_dim:
        b2d = jnp.pad(b2d, ((0, 0), (0, np_ - n_dim)))

    # --- cost estimate reflecting actual HBM traffic (incl. grid re-reads) --
    gm, gn, gk = grid
    cost = pl.CostEstimate(
        flops=2 * m * n_dim * k_dim,
        transcendentals=0,
        bytes_accessed=(
            x2d.size * x2d.dtype.itemsize * gn      # x re-read per N block
            + w.size * w.dtype.itemsize * gm        # W re-read per M block
            + b2d.size * b2d.dtype.itemsize * gm
            + mp * np_ * out_itemsize               # output writeback
        ),
    )

    if direct_f32:
        kernel = _linear_kernel_f32
        scratch_shapes = []
    else:
        kernel = _linear_kernel_acc
        scratch_shapes = [pltpu.VMEM((tm, tn), jnp.float32)]

    out2d = pl.pallas_call(
        kernel,
        out_shape=jax.ShapeDtypeStruct((mp, np_), out_dtype),
        grid_spec=pl.GridSpec(
            grid=grid,
            in_specs=[
                pl.BlockSpec((tm, tk), lambda i, j, k: (i, k)),   # x tile
                pl.BlockSpec((tn, tk), lambda i, j, k: (j, k)),   # W tile ([N,K])
                pl.BlockSpec((1, tn), lambda i, j, k: (0, j)),    # bias tile
            ],
            out_specs=pl.BlockSpec((tm, tn), lambda i, j, k: (i, j)),
            scratch_shapes=scratch_shapes,
        ),
        compiler_params=pltpu.CompilerParams(
            dimension_semantics=("parallel", "parallel", "arbitrary"),
            vmem_limit_bytes=32 << 20,
        ),
        cost_estimate=cost,
    )(x2d, w, b2d)

    out2d = out2d[:m, :n_dim]
    return out2d.reshape(*lead_shape, n_dim)


if __name__ == "__main__":
    # Small shapes consistent with wrapping an nn.Linear:
    #   batch=2, seq=8, in_features=32, out_features=64
    key = jax.random.PRNGKey(0)
    k_x, k_w, k_b = jax.random.split(key, 3)

    batch, seq, in_features, out_features = 2, 8, 32, 64

    x = jax.random.normal(k_x, (batch, seq, in_features), dtype=jnp.float32)
    # original nn.Linear weights (deterministic synthetic init);
    # PoincareBallWrappedLinear copies these into its poincare layer verbatim.
    weight = (
        jax.random.normal(k_w, (out_features, in_features), dtype=jnp.float32) * 0.1
    )
    bias = jax.random.normal(k_b, (out_features,), dtype=jnp.float32) * 0.01

    out = poincare_wrapped_linear(x, weight, bias)
    out = jax.block_until_ready(out)

    # correctness check against plain-JAX reference (F.linear semantics)
    ref = x @ weight.T + bias
    assert out.shape == (batch, seq, out_features)
    assert jnp.allclose(out, ref, atol=1e-5, rtol=1e-5)

    print("KERNEL_OK")
</pallas_src>

<mosaic_0001>
module attributes {stable_mosaic.version = 11 : i64} {
  func.func @_linear_kernel_f32(%arg0: i32, %arg1: i32, %arg2: i32, %arg3: memref<8x128xf32, #tpu.memory_space<vmem>>, %arg4: memref<128x128xf32, #tpu.memory_space<vmem>>, %arg5: memref<1x128xf32, #tpu.memory_space<vmem>>, %arg6: memref<8x128xf32, #tpu.memory_space<vmem>>) attributes {dimension_semantics = [#tpu.dimension_semantics<parallel>, #tpu.dimension_semantics<parallel>, #tpu.dimension_semantics<arbitrary>], iteration_bounds = array<i64: 2, 1, 1>, scalar_prefetch = 0 : i64, scratch_operands = 0 : i64, tpu.core_type = #tpu.core_type<tc>, window_params = [{transform_indices = @transform_0, window_bounds = array<i64: 8, 128>}, {transform_indices = @transform_1, window_bounds = array<i64: 128, 128>}, {transform_indices = @transform_2, window_bounds = array<i64: 1, 128>}, {transform_indices = @transform_3, window_bounds = array<i64: 8, 128>}]} {
    %c0_i32 = arith.constant 0 : i32
    %0 = arith.cmpi eq, %arg2, %c0_i32 : i32
    %1 = arith.extui %0 : i1 to i32
    %c0_i32_0 = arith.constant 0 : i32
    %2 = arith.cmpi ne, %1, %c0_i32_0 : i32
    scf.if %2 {
      %c0_8 = arith.constant 0 : index
      %c0_9 = arith.constant 0 : index
      %9 = vector.load %arg5[%c0_8, %c0_9] : memref<1x128xf32, #tpu.memory_space<vmem>>, vector<1x128xf32>
      %10 = vector.shape_cast %9 : vector<1x128xf32> to vector<1x128xf32>
      %11 = vector.broadcast %10 : vector<1x128xf32> to vector<8x128xf32>
      %c0_10 = arith.constant 0 : index
      %c0_11 = arith.constant 0 : index
      %12 = vector.load %arg6[%c0_10, %c0_11] : memref<8x128xf32, #tpu.memory_space<vmem>>, vector<8x128xf32>
      tpu.vector_store %arg6[%c0_10, %c0_11], %11 {strides = array<i32>} : memref<8x128xf32, #tpu.memory_space<vmem>>, vector<8x128xf32>,
    } else {
    }
    %c0 = arith.constant 0 : index
    %c0_1 = arith.constant 0 : index
    %3 = vector.load %arg6[%c0, %c0_1] : memref<8x128xf32, #tpu.memory_space<vmem>>, vector<8x128xf32>
    %c0_2 = arith.constant 0 : index
    %c0_3 = arith.constant 0 : index
    %4 = vector.load %arg3[%c0_2, %c0_3] : memref<8x128xf32, #tpu.memory_space<vmem>>, vector<8x128xf32>
    %c0_4 = arith.constant 0 : index
    %c0_5 = arith.constant 0 : index
    %5 = vector.load %arg4[%c0_4, %c0_5] : memref<128x128xf32, #tpu.memory_space<vmem>>, vector<128x128xf32>
    %cst = arith.constant dense<0.000000e+00> : vector<8x128xf32>
    %6 = tpu.matmul %4, %5, %cst {dimension_numbers = #tpu.dot_dimension_numbers<[1], [1], [0], [0], [0, 0, 1, 0], [], []>} : vector<8x128xf32>, vector<128x128xf32>, vector<8x128xf32> -> vector<8x128xf32>
    %7 = arith.addf %3, %6 : vector<8x128xf32>
    %c0_6 = arith.constant 0 : index
    %c0_7 = arith.constant 0 : index
    %8 = vector.load %arg6[%c0_6, %c0_7] : memref<8x128xf32, #tpu.memory_space<vmem>>, vector<8x128xf32>
    tpu.vector_store %arg6[%c0_6, %c0_7], %7 {strides = array<i32>} : memref<8x128xf32, #tpu.memory_space<vmem>>, vector<8x128xf32>,
    return
  }
  func.func @transform_0(%arg0: i32, %arg1: i32, %arg2: i32) -> (i32, i32) {
    %c0_i32 = arith.constant 0 : i32
    return %arg0, %arg2 : i32, i32
  }
  func.func @transform_1(%arg0: i32, %arg1: i32, %arg2: i32) -> (i32, i32) {
    %c0_i32 = arith.constant 0 : i32
    return %arg1, %arg2 : i32, i32
  }
  func.func @transform_2(%arg0: i32, %arg1: i32, %arg2: i32) -> (i32, i32) {
    %c0_i32 = arith.constant 0 : i32
    %c0_i32_0 = arith.constant 0 : i32
    return %c0_i32, %arg1 : i32, i32
  }
  func.func @transform_3(%arg0: i32, %arg1: i32, %arg2: i32) -> (i32, i32) {
    %c0_i32 = arith.constant 0 : i32
    return %arg0, %arg1 : i32, i32
  }
}

</mosaic_0001>

<llo_original>
// kernel: poincare_wrapped_linear.1
$region0: #{poincare_wrapped_linear.1}
  #allocation0 [shape = 'u32[]', space=smem, size = 0x4, offset = 0x4, fixed_abs, tag = 'smem constant byte address 0x4 - core index']
  #allocation1 [shape = 'u32[144,128]{1,0:T(1,128)}', space=vmem, size = 0x12000, scoped, tag = 'internal scratch']
  %s0 = inlined_call_operand.vmem [shape: f32[16,128], index: 0, kind: input, shape index: {}]
  %s1 = inlined_call_operand.vmem [shape: f32[128,128], index: 1, kind: input, shape index: {}]
  %s2 = inlined_call_operand.vmem [shape: f32[1,128], index: 2, kind: input, shape index: {}]
  %s3 = inlined_call_operand.vmem [shape: f32[16,128], index: 3, kind: output, shape index: {}]
  %s4 = sld [smem:[#allocation0]]
  $region49: #{poincare_wrapped_linear.1} parent=0
    _
  %s6 = ssub.s32 1, %s4
  %s7 = scalar_select 0, %s6, %s4
  loop: start=0, step=1, limit=4
  $region2: #{poincare_wrapped_linear.1} parent=0 // loop_pre_header
    _
  $region3: #{poincare_wrapped_linear.1} parent=0 // loop_header
    %s9 = sphi 0, %s13
    %p10 = scmp.ge.s32.totalorder %s9, 4
    %s16 = sphi 0, %s35
    %s17 = sphi 0, %s31
    %s18 = sphi 0, %s27
    %s19 = sphi 0, %s16
    %s20 = sphi 0, %s17
    %s21 = sphi 0, %s18
    %s22 = sphi 0, %s19
    %s23 = sphi 0, %s20
    %s24 = sphi 0, %s21
    %s40 = sphi 0, %s42
    %s43 = sphi 0, %s40
    %s44 = sphi 0, %s43
    %s60 = sphi 0, %s44
    %s68 = sphi 0, %s70
    %s71 = sphi 0, %s68
    %s72 = sphi 0, %s71
    %s88 = sphi 0, %s72
    %s94 = sphi 0, %s96
    %s97 = sphi 0, %s94
    %s98 = sphi 0, %s97
    %s114 = sphi 0, %s98
    %s122 = sphi 0, %s124
    %s125 = sphi 0, %s122
    %s126 = sphi 0, %s125
    %s142 = sphi 0, %s126
  $region4: #{poincare_wrapped_linear.1} parent=0 // loop_header_branch
    %12 = sbr.rel (%p10) target = $region8
  $region5: #{poincare_wrapped_linear.1} parent=0 // loop_body
    %s14 = ssub.s32 %s9, 1
    %s15 = ssub.s32 %s9, 2
    %s25 = sadd.s32 1, %s18
    %p26 = scmp.ge.s32.totalorder %s25, 1
    %s27 = scalar_select %p26, 0, %s25
    %s28 = sadd.s32 1, %s17
    %s29 = scalar_select %p26, %s28, %s17
    %p30 = scmp.ge.s32.totalorder %s29, 1
    %s31 = scalar_select %p30, 0, %s29
    %s32 = sadd.s32 1, %s16
    %s33 = scalar_select %p30, %s32, %s16
    %p34 = scmp.ge.s32.totalorder %s33, 2
    %s35 = scalar_select %p34, 0, %s33
    %s36 = ssub.s32 %s16, %s35
    %s37 = ssub.s32 %s18, %s27
    %s38 = sor.u32 %s36, %s37
    %p39 = scmp.eq.s32.totalorder %s38, 0
    %s41 = sadd.s32 %s40, 1
    %s42 = scalar_select %p39, %s40, %s41
    %p45 = pneg %p39
    %p46 = scmp.eq.s32.totalorder %s9, 1
    %p47 = por %p45, %p46
    %p48 = scmp.ne.s32.totalorder %s40, %s43
    %p49 = scmp.eq.s32.totalorder %s9, 0
    %p50 = por %p48, %p49
    %p51 = scmp.ne.s32.totalorder %s40, %s43
    %p52 = scmp.eq.s32.totalorder %s14, 1
    %p53 = por %p51, %p52
    %p54 = scmp.ne.s32.totalorder %s43, %s44
    %p55 = scmp.eq.s32.totalorder %s14, 0
    %p56 = por %p54, %p55
    %p57 = scmp.ne.s32.totalorder %s43, %s44
    %p58 = scmp.eq.s32.totalorder %s15, 1
    %p59 = por %p57, %p58
    %p61 = scmp.ne.s32.totalorder %s44, %s60
    %p62 = scmp.eq.s32.totalorder %s15, 0
    %p63 = por %p61, %p62
    %s64 = ssub.s32 %s17, %s31
    %s65 = ssub.s32 %s18, %s27
    %s66 = sor.u32 %s64, %s65
    %p67 = scmp.eq.s32.totalorder %s66, 0
    %s69 = sadd.s32 %s68, 1
    %s70 = scalar_select %p67, %s68, %s69
    %p73 = pneg %p67
    %p74 = scmp.eq.s32.totalorder %s9, 1
    %p75 = por %p73, %p74
    %p76 = scmp.ne.s32.totalorder %s68, %s71
    %p77 = scmp.eq.s32.totalorder %s9, 0
    %p78 = por %p76, %p77
    %p79 = scmp.ne.s32.totalorder %s68, %s71
    %p80 = scmp.eq.s32.totalorder %s14, 1
    %p81 = por %p79, %p80
    %p82 = scmp.ne.s32.totalorder %s71, %s72
    %p83 = scmp.eq.s32.totalorder %s14, 0
    %p84 = por %p82, %p83
    %p85 = scmp.ne.s32.totalorder %s71, %s72
    %p86 = scmp.eq.s32.totalorder %s15, 1
    %p87 = por %p85, %p86
    %p89 = scmp.ne.s32.totalorder %s72, %s88
    %p90 = scmp.eq.s32.totalorder %s15, 0
    %p91 = por %p89, %p90
    %s92 = ssub.s32 %s17, %s31
    %p93 = scmp.eq.s32.totalorder %s92, 0
    %s95 = sadd.s32 %s94, 1
    %s96 = scalar_select %p93, %s94, %s95
    %p99 = pneg %p93
    %p100 = scmp.eq.s32.totalorder %s9, 1
    %p101 = por %p99, %p100
    %p102 = scmp.ne.s32.totalorder %s94, %s97
    %p103 = scmp.eq.s32.totalorder %s9, 0
    %p104 = por %p102, %p103
    %p105 = scmp.ne.s32.totalorder %s94, %s97
    %p106 = scmp.eq.s32.totalorder %s14, 1
    %p107 = por %p105, %p106
    %p108 = scmp.ne.s32.totalorder %s97, %s98
    %p109 = scmp.eq.s32.totalorder %s14, 0
    %p110 = por %p108, %p109
    %p111 = scmp.ne.s32.totalorder %s97, %s98
    %p112 = scmp.eq.s32.totalorder %s15, 1
    %p113 = por %p111, %p112
    %p115 = scmp.ne.s32.totalorder %s98, %s114
    %p116 = scmp.eq.s32.totalorder %s15, 0
    %p117 = por %p115, %p116
    %s118 = ssub.s32 %s16, %s35
    %s119 = ssub.s32 %s17, %s31
    %s120 = sor.u32 %s118, %s119
    %p121 = scmp.eq.s32.totalorder %s120, 0
    %s123 = sadd.s32 %s122, 1
    %s124 = scalar_select %p121, %s122, %s123
    %p127 = pneg %p121
    %p128 = scmp.eq.s32.totalorder %s9, 1
    %p129 = por %p127, %p128
    %p130 = scmp.ne.s32.totalorder %s122, %s125
    %p131 = scmp.eq.s32.totalorder %s9, 0
    %p132 = por %p130, %p131
    %p133 = scmp.ne.s32.totalorder %s122, %s125
    %p134 = scmp.eq.s32.totalorder %s14, 1
    %p135 = por %p133, %p134
    %p136 = scmp.ne.s32.totalorder %s125, %s126
    %p137 = scmp.eq.s32.totalorder %s14, 0
    %p138 = por %p136, %p137
    %p139 = scmp.ne.s32.totalorder %s125, %s126
    %p140 = scmp.eq.s32.totalorder %s15, 1
    %p141 = por %p139, %p140
    %p143 = scmp.ne.s32.totalorder %s126, %s142
    %p144 = scmp.eq.s32.totalorder %s15, 0
    %p145 = por %p143, %p144
    %p146 = scmp.le.s32.totalorder 1, %s9
    %p147 = scmp.lt.s32.totalorder %s9, 3
    %p148 = pnand %p146, %p147
    %p149 = pneg %p148
    // Predicated region
    $region9: #{poincare_wrapped_linear.1} parent=5 // pred_check
      _
    $region10: #{poincare_wrapped_linear.1} parent=5 // pred_check_branch
      %151 = sbr.rel (%p148) target = $region12
    $region11: #{poincare_wrapped_linear.1} parent=5 // pred_region
      %s152 = ssub.s32 %s9, 1
      // Predicated region
      $region13: #{poincare_wrapped_linear.1} parent=11 // pred_check
        %p153 = pneg %p84
      $region14: #{poincare_wrapped_linear.1} parent=11 // pred_check_branch
        %155 = sbr.rel (%p153) target = $region16
      $region15: #{poincare_wrapped_linear.1} parent=11 // pred_region
        %s156 = smul.u32 16, %s20
        %p157 = scmp.lt.s32.totalorder %s156, 15
        %s158 = scalar_select %p157, %s156, 15
        %p159 = scmp.lt.s32.totalorder %s21, 0
        %s160 = scalar_select %p159, %s21, 0
        %s161 = sadd.s32 %s160, %s158
        %s162 = smul.addr %s161, 8
        %s163 = scalar_lea.vmem %s1, %s162
        %s164 = smul.u32 16, %s20
      $region16: #{poincare_wrapped_linear.1} parent=11 // pred_fallthru
        _
      // Predicated region
      $region17: #{poincare_wrapped_linear.1} parent=11 // pred_check
        %p165 = pneg %p110
      $region18: #{poincare_wrapped_linear.1} parent=11 // pred_check_branch
        %167 = sbr.rel (%p165) target = $region20
      $region19: #{poincare_wrapped_linear.1} parent=11 // pred_region
        %p168 = scmp.lt.s32.totalorder %s20, 0
        %s169 = scalar_select %p168, %s20, 0
        %s170 = scalar_lea.vmem %s2, %s169
      $region20: #{poincare_wrapped_linear.1} parent=11 // pred_fallthru
        _
    $region12: #{poincare_wrapped_linear.1} parent=5 // pred_fallthru
      _
    %p171 = scmp.lt.s32.totalorder %s9, 2
    // Predicated region
    $region21: #{poincare_wrapped_linear.1} parent=5 // pred_check
      %p172 = pneg %p171
    $region22: #{poincare_wrapped_linear.1} parent=5 // pred_check_branch
      %174 = sbr.rel (%p172) target = $region24
    $region23: #{poincare_wrapped_linear.1} parent=5 // pred_region
      // Predicated region
      $region25: #{poincare_wrapped_linear.1} parent=23 // pred_check
        %p175 = pneg %p50
      $region26: #{poincare_wrapped_linear.1} parent=23 // pred_check_branch
        %177 = sbr.rel (%p175) target = $region28
      $region27: #{poincare_wrapped_linear.1} parent=23 // pred_region
        %p178 = scmp.lt.s32.totalorder %s16, 1
        %s179 = scalar_select %p178, %s16, 1
        %p180 = scmp.lt.s32.totalorder %s18, 0
        %s181 = scalar_select %p180, %s18, 0
        %s182 = sadd.s32 %s181, %s179
        %s183 = smul.addr %s182, 8
        %s184 = scalar_lea.vmem %s0, %s183
      $region28: #{poincare_wrapped_linear.1} parent=23 // pred_fallthru
        _
    $region24: #{poincare_wrapped_linear.1} parent=5 // pred_fallthru
      _
    %p185 = scmp.le.s32.totalorder 1, %s9
    %p186 = scmp.lt.s32.totalorder %s9, 3
    %p187 = pnand %p185, %p186
    %p188 = pneg %p187
    // Predicated region
    $region29: #{poincare_wrapped_linear.1} parent=5 // pred_check
      _
    $region30: #{poincare_wrapped_linear.1} parent=5 // pred_check_branch
      %190 = sbr.rel (%p187) target = $region32
    $region31: #{poincare_wrapped_linear.1} parent=5 // pred_region
      %s191 = ssub.s32 %s9, 1
      %p192 = scmp.lt.s32.totalorder %s19, 1
      %s193 = scalar_select %p192, %s19, 1
      %p194 = scmp.lt.s32.totalorder %s21, 0
      %s195 = scalar_select %p194, %s21, 0
      %s196 = sadd.s32 %s195, %s193
      %s197 = smul.addr %s196, 8
      %s198 = scalar_lea.vmem %s0, %s197
      %p199 = pneg %p56
      %p200 = pneg %p53
      %s201 = smul.u32 16, %s20
      %p202 = scmp.lt.s32.totalorder %s201, 15
      %s203 = scalar_select %p202, %s201, 15
      %p204 = scmp.lt.s32.totalorder %s21, 0
      %s205 = scalar_select %p204, %s21, 0
      %s206 = sadd.s32 %s205, %s203
      %s207 = smul.addr %s206, 8
      %s208 = scalar_lea.vmem %s1, %s207
      %p209 = pneg %p84
      %p210 = pneg %p81
      %p211 = scmp.lt.s32.totalorder %s20, 0
      %s212 = scalar_select %p211, %s20, 0
      %s213 = scalar_lea.vmem %s2, %s212
      %p214 = pneg %p110
      %p215 = pneg %p107
      %p216 = pneg %p138
      %p217 = pneg %p135
      %p218 = scmp.lt.s32.totalorder %s19, 1
      %s219 = scalar_select %p218, %s19, 1
      %p220 = scmp.lt.s32.totalorder %s20, 0
      %s221 = scalar_select %p220, %s20, 0
      %s222 = sadd.s32 %s221, %s219
      %s223 = smul.addr %s222, 8
      %s224 = scalar_lea.vmem %s3, %s223
      %p225 = scmp.lt.s32.totalorder %s19, 1
      %s226 = scalar_select %p225, %s19, 1
      %p227 = scmp.lt.s32.totalorder %s21, 0
      %s228 = scalar_select %p227, %s21, 0
      %s229 = sadd.s32 %s228, %s226
      %s230 = smul.addr %s229, 8
      %s231 = scalar_lea.vmem %s0, %s230
      %s232 = smul.u32 16, %s20
      %p233 = scmp.lt.s32.totalorder %s232, 15
      %s234 = scalar_select %p233, %s232, 15
      %p235 = scmp.lt.s32.totalorder %s21, 0
      %s236 = scalar_select %p235, %s21, 0
      %s237 = sadd.s32 %s236, %s234
      %s238 = smul.addr %s237, 8
      %s239 = scalar_lea.vmem %s1, %s238
      %s240 = smul.u32 16, %s20
      %p241 = scmp.lt.s32.totalorder %s20, 0
      %s242 = scalar_select %p241, %s20, 0
      %s243 = scalar_lea.vmem %s2, %s242
      %p244 = scmp.lt.s32.totalorder %s19, 1
      %s245 = scalar_select %p244, %s19, 1
      %p246 = scmp.lt.s32.totalorder %s20, 0
      %s247 = scalar_select %p246, %s20, 0
      %s248 = sadd.s32 %s247, %s245
      %s249 = smul.addr %s248, 8
      %s250 = scalar_lea.vmem %s3, %s249
      %p251 = scmp.eq.s32.totalorder %s21, 0
      // Predicated region
      $region33: #{poincare_wrapped_linear.1} parent=31 // pred_check
        %p252 = pneg %p251
      $region34: #{poincare_wrapped_linear.1} parent=31 // pred_check_branch
        %254 = sbr.rel (%p252) target = $region36
      $region35: #{poincare_wrapped_linear.1} parent=31 // pred_region
        %v255 = vld [vmem:[%s243] sm:$0x1]
        %v257 = vlaneseq
        %v258 = vshrl.u32 %v257, 7
        %v259 = vsub.s32 0, %v258
        %v260 = vrot.slane %v255, %v259
        %262 = vst [vmem:[%s250] sm:$0xff] %v260
      $region36: #{poincare_wrapped_linear.1} parent=31 // pred_fallthru
        _
      %v263 = vld [vmem:[%s250] sm:$0xff]
      %v264 = vld [vmem:[%s231] sm:$0xff]
      %v265 = vld [vmem:[%s239] sm:$0xff]
      %v266 = vld [vmem:[%s239 + $0x8] sm:$0xff]
      %v267 = vld [vmem:[%s239 + $0x10] sm:$0xff]
      %v268 = vld [vmem:[%s239 + $0x18] sm:$0xff]
      %v269 = vld [vmem:[%s239 + $0x20] sm:$0xff]
      %v270 = vld [vmem:[%s239 + $0x28] sm:$0xff]
      %v271 = vld [vmem:[%s239 + $0x30] sm:$0xff]
      %v272 = vld [vmem:[%s239 + $0x38] sm:$0xff]
      %v273 = vld [vmem:[%s239 + $0x40] sm:$0xff]
      %v274 = vld [vmem:[%s239 + $0x48] sm:$0xff]
      %v275 = vld [vmem:[%s239 + $0x50] sm:$0xff]
      %v276 = vld [vmem:[%s239 + $0x58] sm:$0xff]
      %v277 = vld [vmem:[%s239 + $0x60] sm:$0xff]
      %v278 = vld [vmem:[%s239 + $0x68] sm:$0xff]
      %v279 = vld [vmem:[%s239 + $0x70] sm:$0xff]
      %v280 = vld [vmem:[%s239 + $0x78] sm:$0xff]
      %281 = vmatprep.subr.mxu0 0.0
      %282 = vmatpush1.xpose.msra.mxu0 %v280
      %283 = vmatprep.subr.mxu0 0.0
      %284 = vmatpush1.xpose.msra.mxu0 %v279
      %285 = vmatprep.subr.mxu0 0.0
      %286 = vmatpush1.xpose.msra.mxu0 %v278
      %287 = vmatprep.subr.mxu0 0.0
      %288 = vmatpush1.xpose.msra.mxu0 %v277
      %289 = vmatprep.subr.mxu0 0.0
      %290 = vmatpush1.xpose.msra.mxu0 %v276
      %291 = vmatprep.subr.mxu0 0.0
      %292 = vmatpush1.xpose.msra.mxu0 %v275
      %293 = vmatprep.subr.mxu0 0.0
      %294 = vmatpush1.xpose.msra.mxu0 %v274
      %295 = vmatprep.subr.mxu0 0.0
      %296 = vmatpush1.xpose.msra.mxu0 %v273
      %297 = vmatprep.subr.mxu0 0.0
      %298 = vmatpush1.xpose.msra.mxu0 %v272
      %299 = vmatprep.subr.mxu0 0.0
      %300 = vmatpush1.xpose.msra.mxu0 %v271
      %301 = vmatprep.subr.mxu0 0.0
      %302 = vmatpush1.xpose.msra.mxu0 %v270
      %303 = vmatprep.subr.mxu0 0.0
      %304 = vmatpush1.xpose.msra.mxu0 %v269
      %305 = vmatprep.subr.mxu0 0.0
      %306 = vmatpush1.xpose.msra.mxu0 %v268
      %307 = vmatprep.subr.mxu0 0.0
      %308 = vmatpush1.xpose.msra.mxu0 %v267
      %309 = vmatprep.subr.mxu0 0.0
      %310 = vmatpush1.xpose.msra.mxu0 %v266
      %311 = vmatprep.subr.mxu0 0.0
      %312 = vmatpush1.xpose.msra.mxu0 %v265
      %313 = vmatprep.subr.mxu0 0.0
      %314 = vmatpush2.xpose.msra.mxu0 0.0
      %315 = vmatprep.subr.mxu0 0.0
      %316 = vmatpush2.xpose.msra.mxu0 0.0
      %317 = vmatprep.subr.mxu0 0.0
      %318 = vmatpush2.xpose.msra.mxu0 0.0
      %319 = vmatprep.subr.mxu0 0.0
      %320 = vmatpush2.xpose.msra.mxu0 0.0
      %321 = vmatprep.subr.mxu0 0.0
      %322 = vmatpush2.xpose.msra.mxu0 0.0
      %323 = vmatprep.subr.mxu0 0.0
      %324 = vmatpush2.xpose.msra.mxu0 0.0
      %325 = vmatprep.subr.mxu0 0.0
      %326 = vmatpush2.xpose.msra.mxu0 0.0
      %327 = vmatprep.subr.mxu0 0.0
      %328 = vmatpush2.xpose.msra.mxu0 0.0
      %329 = vmatprep.subr.mxu0 0.0
      %330 = vmatpush2.xpose.msra.mxu0 0.0
      %331 = vmatprep.subr.mxu0 0.0
      %332 = vmatpush2.xpose.msra.mxu0 0.0
      %333 = vmatprep.subr.mxu0 0.0
      %334 = vmatpush2.xpose.msra.mxu0 0.0
      %335 = vmatprep.subr.mxu0 0.0
      %336 = vmatpush2.xpose.msra.mxu0 0.0
      %337 = vmatprep.subr.mxu0 0.0
      %338 = vmatpush2.xpose.msra.mxu0 0.0
      %339 = vmatprep.subr.mxu0 0.0
      %340 = vmatpush2.xpose.msra.mxu0 0.0
      %341 = vmatprep.subr.mxu0 0.0
      %342 = vmatpush2.xpose.msra.mxu0 0.0
      %343 = vmatprep.subr.mxu0 0.0
      %344 = vmatpush2.xpose.msra.mxu0 0.0
      %345 = vmatprep.mubr.f32.mxu0 0.0
      %346 = vmatmul.mubr.f32.gmra.mxu0 %v264
      %v347 = vpop.f32.mrf.mxu0
      %v348 = vadd.f32 0.0, %v347
      %v349 = vpop.f32.mrf.mxu0
      %350 = vdwg.mxu0
      %v351 = vadd.f32 %v263, %v348
      %352 = vst [vmem:[%s250] sm:$0xff] %v351
      %p353 = scmp.lt.s32.totalorder %s19, 1
      %s354 = scalar_select %p353, %s19, 1
      %p355 = scmp.lt.s32.totalorder %s20, 0
      %s356 = scalar_select %p355, %s20, 0
      %s357 = sadd.s32 %s356, %s354
      %s358 = smul.addr %s357, 8
      %s359 = scalar_lea.vmem %s3, %s358
      // Predicated region
      $region37: #{poincare_wrapped_linear.1} parent=31 // pred_check
        %p360 = pneg %p135
      $region38: #{poincare_wrapped_linear.1} parent=31 // pred_check_branch
        %362 = sbr.rel (%p360) target = $region40
      $region39: #{poincare_wrapped_linear.1} parent=31 // pred_region
        _
      $region40: #{poincare_wrapped_linear.1} parent=31 // pred_fallthru
        _
    $region32: #{poincare_wrapped_linear.1} parent=5 // pred_fallthru
      _
    %p363 = scmp.le.s32.totalorder 2, %s9
    // Predicated region
    $region41: #{poincare_wrapped_linear.1} parent=5 // pred_check
      %p364 = pneg %p363
    $region42: #{poincare_wrapped_linear.1} parent=5 // pred_check_branch
      %366 = sbr.rel (%p364) target = $region44
    $region43: #{poincare_wrapped_linear.1} parent=5 // pred_region
      %s367 = ssub.s32 %s9, 2
      // Predicated region
      $region45: #{poincare_wrapped_linear.1} parent=43 // pred_check
        %p368 = pneg %p141
      $region46: #{poincare_wrapped_linear.1} parent=43 // pred_check_branch
        %370 = sbr.rel (%p368) target = $region48
      $region47: #{poincare_wrapped_linear.1} parent=43 // pred_region
        %p371 = scmp.lt.s32.totalorder %s22, 1
        %s372 = scalar_select %p371, %s22, 1
        %p373 = scmp.lt.s32.totalorder %s23, 0
        %s374 = scalar_select %p373, %s23, 0
        %s375 = sadd.s32 %s374, %s372
        %s376 = smul.addr %s375, 8
        %s377 = scalar_lea.vmem %s3, %s376
      $region48: #{poincare_wrapped_linear.1} parent=43 // pred_fallthru
        _
    $region44: #{poincare_wrapped_linear.1} parent=5 // pred_fallthru
      _
  $region6: #{poincare_wrapped_linear.1} parent=0 // loop_footer
    %s13 = sadd.s32 1, %s9
  $region7: #{poincare_wrapped_linear.1} parent=0 // loop_footer_branch
    %8 = sbr.rel target = $region3
  $region8: #{poincare_wrapped_linear.1} parent=0 // loop_exit
    _

</llo_original>
